<compile_context>
chip_gen: v5e
topology: v5e:2x2
jax: 0.10.0
libtpu: 0.0.40
codegen_flags: <defaults>
</compile_context>

<pallas_src>
import math
import jax
import jax.numpy as jnp
from jax.experimental import pallas as pl
from jax.experimental.pallas import tpu as pltpu

BN_EPS = 1e-3                       # yolov5 initialize_weights() sets BatchNorm eps=1e-3
VMEM_LIMIT = 48 * 1024 * 1024       # fits v7x's 64 MiB physical VMEM (and v5e/v6e 128 MiB)
_SINGLE_K_MAX = 3072                # K up to this size -> single-block, no-accumulator path


def _round_up(x, m):
    return (x + m - 1) // m * m


# ---------------------------------------------------------------------------
# Pallas kernels
# ---------------------------------------------------------------------------
def _apply_act(y, act):
    if act == "hardswish":            # nn.Hardswish: x * relu6(x + 3) / 6
        return y * jnp.clip(y + 3.0, 0.0, 6.0) * (1.0 / 6.0)
    if act == "leaky":                # nn.LeakyReLU(0.1)
        return jnp.where(y >= 0.0, y, 0.1 * y)
    return y                          # identity (Detect 1x1 heads)


def _conv_kernel_single(act, has_res):
    """Single-K-block fused matmul + bias + act (+ residual): no accumulator scratch."""
    if has_res:
        def kernel(x_ref, w_ref, b_ref, r_ref, o_ref):
            a = x_ref[...].astype(jnp.bfloat16)
            y = jnp.dot(a, w_ref[...], preferred_element_type=jnp.float32) + b_ref[...]
            o_ref[...] = _apply_act(y, act) + r_ref[...]
    else:
        def kernel(x_ref, w_ref, b_ref, o_ref):
            a = x_ref[...].astype(jnp.bfloat16)
            y = jnp.dot(a, w_ref[...], preferred_element_type=jnp.float32) + b_ref[...]
            o_ref[...] = _apply_act(y, act)
    return kernel


def _conv_kernel_multi(act, has_res):
    """K-tiled fused matmul with f32 accumulator; epilogue on the last K step."""
    if has_res:
        def kernel(x_ref, w_ref, b_ref, r_ref, o_ref, acc_ref):
            @pl.when(pl.program_id(2) == 0)
            def _():
                acc_ref[...] = jnp.zeros_like(acc_ref)
            a = x_ref[...].astype(jnp.bfloat16)
            acc_ref[...] += jnp.dot(a, w_ref[...], preferred_element_type=jnp.float32)

            @pl.when(pl.program_id(2) == pl.num_programs(2) - 1)
            def _():
                y = _apply_act(acc_ref[...] + b_ref[...], act)
                o_ref[...] = y + r_ref[...]
    else:
        def kernel(x_ref, w_ref, b_ref, o_ref, acc_ref):
            @pl.when(pl.program_id(2) == 0)
            def _():
                acc_ref[...] = jnp.zeros_like(acc_ref)
            a = x_ref[...].astype(jnp.bfloat16)
            acc_ref[...] += jnp.dot(a, w_ref[...], preferred_element_type=jnp.float32)

            @pl.when(pl.program_id(2) == pl.num_programs(2) - 1)
            def _():
                o_ref[...] = _apply_act(acc_ref[...] + b_ref[...], act)
    return kernel


def _pool5_kernel(x_ref, o_ref):
    """5x5 stride-1 max pool (input pre-padded by 2 with -inf), separable in VMEM."""
    xp = x_ref[0]                         # (H+4, W+4, C)
    Hp, Wp, _ = xp.shape
    H, W = Hp - 4, Wp - 4
    t = xp[:, 0:W, :]                     # max over the W window
    for j in range(1, 5):
        t = jnp.maximum(t, xp[:, j:j + W, :])
    o = t[0:H, :, :]                      # max over the H window
    for i in range(1, 5):
        o = jnp.maximum(o, t[i:i + H, :, :])
    o_ref[0] = o


# ---------------------------------------------------------------------------
# Fused conv wrapper (im2col / reshape in glue; matmul+affine+act+residual in Pallas)
# ---------------------------------------------------------------------------
def fused_conv2d(x, cw, act="hardswish", residual=None):
    """x: (N,H,W,Cin) f32.  cw: BN-folded (Kp,Cout) bf16 weight + (1,Cout) f32 bias."""
    N, H, W, Cin = x.shape
    KH, KW, stride, pad = cw["kh"], cw["kw"], cw["s"], cw["p"]
    wm, bias = cw["w"], cw["b"]
    Kp, Cout = wm.shape
    K = KH * KW * Cin

    if KH == 1 and KW == 1 and stride == 1 and pad == 0:
        # 1x1 conv: no im2col; keep f32 in HBM, cast to bf16 inside the kernel.
        Ho, Wo = H, W
        xm = x.reshape(N * H * W, Cin)
        if Kp != Cin:
            xm = jnp.pad(xm, ((0, 0), (0, Kp - Cin)))
    else:
        # im2col in bf16; patch column order (kh, kw, cin) matches the weight reshape.
        xb = x.astype(jnp.bfloat16)
        if pad > 0:
            xb = jnp.pad(xb, ((0, 0), (pad, pad), (pad, pad), (0, 0)))
        Hp, Wp = xb.shape[1], xb.shape[2]
        Ho = (Hp - KH) // stride + 1
        Wo = (Wp - KW) // stride + 1
        patches = [xb[:, i:i + stride * Ho:stride, j:j + stride * Wo:stride, :]
                   for i in range(KH) for j in range(KW)]
        if Kp != K:          # fold the zero K-padding into the single concat
            patches.append(jnp.zeros((N, Ho, Wo, Kp - K), jnp.bfloat16))
        xm = jnp.concatenate(patches, axis=-1).reshape(N * Ho * Wo, Kp)

    M = N * Ho * Wo
    Mp = _round_up(M, 8)
    rm = residual.reshape(M, Cout) if residual is not None else None
    if Mp != M:              # only for tiny/odd spatial sizes
        xm = jnp.pad(xm, ((0, Mp - M), (0, 0)))
        if rm is not None:
            rm = jnp.pad(rm, ((0, Mp - M), (0, 0)))

    tm = Mp if Mp <= 512 else 512
    tn = Cout if Cout <= 512 else (640 if Cout % 640 == 0 else 512)
    nm, nn = pl.cdiv(Mp, tm), pl.cdiv(Cout, tn)
    has_res = rm is not None
    out_shape = jax.ShapeDtypeStruct((Mp, Cout), jnp.float32)

    if Kp <= _SINGLE_K_MAX:
        in_specs = [pl.BlockSpec((tm, Kp), lambda m, n: (m, 0)),
                    pl.BlockSpec((Kp, tn), lambda m, n: (0, n)),
                    pl.BlockSpec((1, tn), lambda m, n: (0, n))]
        args = [xm, wm, bias]
        if has_res:
            in_specs.append(pl.BlockSpec((tm, tn), lambda m, n: (m, n)))
            args.append(rm)
        out = pl.pallas_call(
            _conv_kernel_single(act, has_res),
            out_shape=out_shape,
            grid_spec=pltpu.PrefetchScalarGridSpec(
                num_scalar_prefetch=0, grid=(nm, nn),
                in_specs=in_specs,
                out_specs=pl.BlockSpec((tm, tn), lambda m, n: (m, n))),
            compiler_params=pltpu.CompilerParams(
                dimension_semantics=("parallel", "parallel"),
                vmem_limit_bytes=VMEM_LIMIT),
        )(*args)
    else:
        tk = 1152 if Kp % 1152 == 0 else 1024
        Kpp = _round_up(Kp, tk)
        if Kpp != Kp:
            xm = jnp.pad(xm, ((0, 0), (0, Kpp - Kp)))
            wm = jnp.pad(wm, ((0, Kpp - Kp), (0, 0)))
        nk = Kpp // tk
        in_specs = [pl.BlockSpec((tm, tk), lambda m, n, k: (m, k)),
                    pl.BlockSpec((tk, tn), lambda m, n, k: (k, n)),
                    pl.BlockSpec((1, tn), lambda m, n, k: (0, n))]
        args = [xm, wm, bias]
        if has_res:
            in_specs.append(pl.BlockSpec((tm, tn), lambda m, n, k: (m, n)))
            args.append(rm)
        out = pl.pallas_call(
            _conv_kernel_multi(act, has_res),
            out_shape=out_shape,
            grid_spec=pltpu.PrefetchScalarGridSpec(
                num_scalar_prefetch=0, grid=(nm, nn, nk),   # reduction axis innermost
                in_specs=in_specs,
                out_specs=pl.BlockSpec((tm, tn), lambda m, n, k: (m, n)),
                scratch_shapes=[pltpu.VMEM((tm, tn), jnp.float32)]),
            compiler_params=pltpu.CompilerParams(
                dimension_semantics=("parallel", "parallel", "arbitrary"),
                vmem_limit_bytes=VMEM_LIMIT),
        )(*args)

    if Mp != M:
        out = out[:M]
    return out.reshape(N, Ho, Wo, Cout)


def maxpool5_same(x):
    """nn.MaxPool2d(5, stride=1, padding=2) on NHWC; one VMEM-resident block per image."""
    N, H, W, C = x.shape
    neg = jnp.finfo(x.dtype).min
    xp = jnp.pad(x, ((0, 0), (2, 2), (2, 2), (0, 0)), constant_values=neg)
    return pl.pallas_call(
        _pool5_kernel,
        out_shape=jax.ShapeDtypeStruct((N, H, W, C), x.dtype),
        grid=(N,),
        in_specs=[pl.BlockSpec((1, H + 4, W + 4, C), lambda n: (n, 0, 0, 0))],
        out_specs=pl.BlockSpec((1, H, W, C), lambda n: (n, 0, 0, 0)),
        compiler_params=pltpu.CompilerParams(
            dimension_semantics=("parallel",),
            vmem_limit_bytes=VMEM_LIMIT),
    )(xp)


def upsample2_nearest(x):
    return jnp.repeat(jnp.repeat(x, 2, axis=1), 2, axis=2)


# ---------------------------------------------------------------------------
# Deterministic parameter init (synthetic; BN affine folded into weights/bias)
# ---------------------------------------------------------------------------
_KEY = [jax.random.PRNGKey(1234)]


def _next_key():
    k, sub = jax.random.split(_KEY[0])
    _KEY[0] = k
    return sub


def _uniform(shape, bound):
    return jax.random.uniform(_next_key(), shape, jnp.float32, -bound, bound)


def _conv_weight(cin, cout, k):
    bound = 1.0 / math.sqrt(cin * k * k)
    return _uniform((k, k, cin, cout), bound)          # HWIO


def _bn_affine(c):
    # eval-mode BN with default init: gamma=1, beta=0, mean=0, var=1, eps=1e-3
    scale = jnp.full((c,), 1.0 / math.sqrt(1.0 + BN_EPS), jnp.float32)
    bias = jnp.zeros((c,), jnp.float32)
    return scale, bias


def _pack(w_hwio, scale, bias, s, p):
    """Fold scale into the weight, reshape to (K,Cout), pad K to x128, cast to bf16."""
    kh, kw, cin, cout = w_hwio.shape
    wm = (w_hwio * scale.reshape(1, 1, 1, cout)).reshape(kh * kw * cin, cout)
    K = kh * kw * cin
    Kp = _round_up(K, 128)
    if Kp != K:
        wm = jnp.pad(wm, ((0, Kp - K), (0, 0)))
    return {"w": wm.astype(jnp.bfloat16),
            "b": bias.reshape(1, cout).astype(jnp.float32),
            "kh": kh, "kw": kw, "s": s, "p": p}


def init_Conv(c1, c2, k, s, p):
    sc, bi = _bn_affine(c2)
    return _pack(_conv_weight(c1, c2, k), sc, bi, s, p)


def init_Bottleneck(c):            # Bottleneck(c, c, shortcut=True, e=1.0)
    return {"cv1": init_Conv(c, c, 1, 1, 0), "cv2": init_Conv(c, c, 3, 1, 1)}


def init_CSP(c1, c2, n, e=0.5):
    c_ = int(c2 * e)
    sc, bi = _bn_affine(2 * c_)
    # cv2/cv3 are bias-free Conv2d; the shared BN on the concat is split per channel
    # block and folded into each of them (LeakyReLU applied in the fused kernel).
    return {"cv1": init_Conv(c1, c_, 1, 1, 0),
            "cv2": _pack(_conv_weight(c1, c_, 1), sc[c_:], bi[c_:], 1, 0),
            "cv3": _pack(_conv_weight(c_, c_, 1), sc[:c_], bi[:c_], 1, 0),
            "cv4": init_Conv(2 * c_, c2, 1, 1, 0),
            "m": [init_Bottleneck(c_) for _ in range(n)]}


def init_SPP(c1, c2):
    c_ = c1 // 2
    return {"cv1": init_Conv(c1, c_, 1, 1, 0),
            "cv2": init_Conv(c_ * 4, c2, 1, 1, 0)}


def init_Detect_head(cin, no):
    bound = 1.0 / math.sqrt(cin)
    w = _uniform((1, 1, cin, no), bound)
    b = _uniform((no,), bound)
    return _pack(w, jnp.ones((no,), jnp.float32), b, 1, 0)


# ---------------------------------------------------------------------------
# Block runners
# ---------------------------------------------------------------------------
def run_fused(cw, x, act="hardswish", residual=None):
    return fused_conv2d(x, cw, act=act, residual=residual)


def run_Focus(p, x):
    # torch.cat([x[...,::2,::2], x[...,1::2,::2], x[...,::2,1::2], x[...,1::2,1::2]], 1)
    x = jnp.concatenate([x[:, ::2, ::2, :], x[:, 1::2, ::2, :],
                         x[:, ::2, 1::2, :], x[:, 1::2, 1::2, :]], axis=-1)
    return run_fused(p, x)


def run_CSP(p, x):
    y = run_fused(p["cv1"], x)
    for b in p["m"]:                       # Bottleneck: y = y + cv2(cv1(y))
        h = run_fused(b["cv1"], y)
        y = run_fused(b["cv2"], h, residual=y)
    y1 = run_fused(p["cv3"], y, act="leaky")
    y2 = run_fused(p["cv2"], x, act="leaky")
    return run_fused(p["cv4"], jnp.concatenate([y1, y2], axis=-1))


def run_SPP(p, x):
    x = run_fused(p["cv1"], x)
    y5 = maxpool5_same(x)                  # 5x5
    y9 = maxpool5_same(y5)                 # 5o5  == 9x9
    y13 = maxpool5_same(y9)                # 5o5o5 == 13x13
    return run_fused(p["cv2"], jnp.concatenate([x, y5, y9, y13], axis=-1))


# ---------------------------------------------------------------------------
# Model
# ---------------------------------------------------------------------------
def init_yolov5x(num_classes=80, num_anchors=3):
    m = {}
    m["focus"] = init_Conv(12, 80, 3, 1, 1)             # model[0] Focus(3,80,3,1,1)
    m["conv1"] = init_Conv(80, 160, 3, 2, 1)            # model[1]
    m["csp2"] = init_CSP(160, 160, 4)                   # model[2]
    m["conv3"] = init_Conv(160, 320, 3, 2, 1)           # model[3]
    m["csp4"] = init_CSP(320, 320, 12)                  # model[4]
    m["conv5"] = init_Conv(320, 640, 3, 2, 1)           # model[5]
    m["csp6"] = init_CSP(640, 640, 12)                  # model[6]
    m["conv7"] = init_Conv(640, 1280, 3, 2, 1)          # model[7]
    m["spp8"] = init_SPP(1280, 1280)                    # model[8]
    m["csp9"] = init_CSP(1280, 1280, 4)                 # model[9]
    m["conv10"] = init_Conv(1280, 640, 1, 1, 0)         # model[10]
    m["csp13"] = init_CSP(1280, 640, 4)                 # model[13]
    m["conv14"] = init_Conv(640, 320, 1, 1, 0)          # model[14]
    m["csp17"] = init_CSP(640, 320, 4)                  # model[17]
    m["conv18"] = init_Conv(320, 320, 3, 2, 1)          # model[18]
    m["csp20"] = init_CSP(640, 640, 4)                  # model[20]
    m["conv21"] = init_Conv(640, 640, 3, 2, 1)          # model[21]
    m["csp23"] = init_CSP(1280, 1280, 4)                # model[23]
    no = num_anchors * (5 + num_classes)
    m["det"] = [init_Detect_head(c, no) for c in (320, 640, 1280)]   # model[24]
    m["na"], m["nc"] = num_anchors, num_classes
    return m


def yolov5x_forward(m, x_nchw):
    x = jnp.transpose(x_nchw, (0, 2, 3, 1)).astype(jnp.float32)      # NCHW -> NHWC
    x = run_Focus(m["focus"], x)
    x = run_fused(m["conv1"], x)
    x = run_CSP(m["csp2"], x)
    x = run_fused(m["conv3"], x)
    x8 = run_CSP(m["csp4"], x)                                        # stride 8, 320ch
    x = run_fused(m["conv5"], x8)
    x16 = run_CSP(m["csp6"], x)                                       # stride 16, 640ch
    x = run_fused(m["conv7"], x16)
    x = run_SPP(m["spp8"], x)
    x = run_CSP(m["csp9"], x)
    x32 = run_fused(m["conv10"], x)                                   # stride 32, 640ch

    t = jnp.concatenate([upsample2_nearest(x32), x16], axis=-1)       # model[11..12]
    t = run_CSP(m["csp13"], t)
    _x16 = run_fused(m["conv14"], t)                                  # stride 16, 320ch

    t = jnp.concatenate([upsample2_nearest(_x16), x8], axis=-1)       # model[15..16]
    head_s8 = run_CSP(m["csp17"], t)                                  # stride 8, 320ch

    t = jnp.concatenate([run_fused(m["conv18"], head_s8), _x16], axis=-1)
    head_s16 = run_CSP(m["csp20"], t)                                 # stride 16, 640ch

    t = jnp.concatenate([run_fused(m["conv21"], head_s16), x32], axis=-1)
    head_s32 = run_CSP(m["csp23"], t)                                 # stride 32, 1280ch

    na, nc = m["na"], m["nc"]
    outs = []
    for cw, h in zip(m["det"], (head_s8, head_s16, head_s32)):
        y = run_fused(cw, h, act="none")
        bs, hh, ww, _ = y.shape
        # transform=True: NCHW->NHWC permute + view(bs,h,w,na,5+nc); channels are
        # already last here, so the reshape is identical.
        outs.append(y.reshape(bs, hh, ww, na, 5 + nc))
    return tuple(outs)


if __name__ == "__main__":
    num_classes, num_anchors = 80, 3
    params = init_yolov5x(num_classes, num_anchors)

    # PyTorch-convention NCHW input (small but stride-32 compatible spatial size)
    x = jax.random.normal(jax.random.PRNGKey(0), (1, 3, 64, 64), jnp.float32)

    heads = yolov5x_forward(params, x)
    heads = jax.block_until_ready(heads)

    assert heads[0].shape == (1, 8, 8, num_anchors, 5 + num_classes)
    assert heads[1].shape == (1, 4, 4, num_anchors, 5 + num_classes)
    assert heads[2].shape == (1, 2, 2, num_anchors, 5 + num_classes)
    assert all(jnp.isfinite(h).all() for h in heads)
    print("KERNEL_OK")
</pallas_src>

<mosaic_0001>
module attributes {stable_mosaic.version = 11 : i64} {
  func.func @kernel(%arg0: i32, %arg1: i32, %arg2: memref<512x128xbf16, #tpu.memory_space<vmem>>, %arg3: memref<128x80xbf16, #tpu.memory_space<vmem>>, %arg4: memref<1x80xf32, #tpu.memory_space<vmem>>, %arg5: memref<512x80xf32, #tpu.memory_space<vmem>>) attributes {dimension_semantics = [#tpu.dimension_semantics<parallel>, #tpu.dimension_semantics<parallel>], iteration_bounds = array<i64: 2, 1>, scalar_prefetch = 0 : i64, scratch_operands = 0 : i64, tpu.core_type = #tpu.core_type<tc>, window_params = [{transform_indices = @transform_0, window_bounds = array<i64: 512, 128>}, {transform_indices = @transform_1, window_bounds = array<i64: 128, 80>}, {transform_indices = @transform_2, window_bounds = array<i64: 1, 80>}, {transform_indices = @transform_3, window_bounds = array<i64: 512, 80>}]} {
    %c0 = arith.constant 0 : index
    %c0_0 = arith.constant 0 : index
    %0 = vector.load %arg2[%c0, %c0_0] : memref<512x128xbf16, #tpu.memory_space<vmem>>, vector<512x128xbf16>
    %c0_1 = arith.constant 0 : index
    %c0_2 = arith.constant 0 : index
    %1 = vector.load %arg3[%c0_1, %c0_2] : memref<128x80xbf16, #tpu.memory_space<vmem>>, vector<128x80xbf16>
    %cst = arith.constant dense<0.000000e+00> : vector<512x80xf32>
    %2 = tpu.matmul %0, %1, %cst {dimension_numbers = #tpu.dot_dimension_numbers<[1], [0], [0], [1], [0, 0, 1, 1], [], []>} : vector<512x128xbf16>, vector<128x80xbf16>, vector<512x80xf32> -> vector<512x80xf32>
    %c0_3 = arith.constant 0 : index
    %c0_4 = arith.constant 0 : index
    %3 = vector.load %arg4[%c0_3, %c0_4] : memref<1x80xf32, #tpu.memory_space<vmem>>, vector<1x80xf32>
    %4 = vector.broadcast %3 : vector<1x80xf32> to vector<512x80xf32>
    %5 = arith.addf %2, %4 : vector<512x80xf32>
    %cst_5 = arith.constant 3.000000e+00 : f32
    %6 = vector.broadcast %cst_5 : f32 to vector<512x80xf32>
    %7 = arith.addf %5, %6 : vector<512x80xf32>
    %cst_6 = arith.constant 0.000000e+00 : f32
    %cst_7 = arith.constant 6.000000e+00 : f32
    %8 = vector.broadcast %cst_6 : f32 to vector<512x80xf32>
    %9 = arith.maximumf %8, %7 : vector<512x80xf32>
    %10 = vector.broadcast %cst_7 : f32 to vector<512x80xf32>
    %11 = arith.minimumf %10, %9 : vector<512x80xf32>
    %12 = arith.mulf %5, %11 : vector<512x80xf32>
    %cst_8 = arith.constant 0.166666672 : f32
    %13 = vector.broadcast %cst_8 : f32 to vector<512x80xf32>
    %14 = arith.mulf %12, %13 : vector<512x80xf32>
    %c0_9 = arith.constant 0 : index
    %c0_10 = arith.constant 0 : index
    %15 = vector.load %arg5[%c0_9, %c0_10] : memref<512x80xf32, #tpu.memory_space<vmem>>, vector<512x80xf32>
    tpu.vector_store %arg5[%c0_9, %c0_10], %14 {strides = array<i32>} : memref<512x80xf32, #tpu.memory_space<vmem>>, vector<512x80xf32>,
    return
  }
  func.func @transform_0(%arg0: i32, %arg1: i32) -> (i32, i32) {
    %c0_i32 = arith.constant 0 : i32
    %c0_i32_0 = arith.constant 0 : i32
    return %arg0, %c0_i32 : i32, i32
  }
  func.func @transform_1(%arg0: i32, %arg1: i32) -> (i32, i32) {
    %c0_i32 = arith.constant 0 : i32
    %c0_i32_0 = arith.constant 0 : i32
    return %c0_i32, %arg1 : i32, i32
  }
  func.func @transform_2(%arg0: i32, %arg1: i32) -> (i32, i32) {
    %c0_i32 = arith.constant 0 : i32
    %c0_i32_0 = arith.constant 0 : i32
    return %c0_i32, %arg1 : i32, i32
  }
  func.func @transform_3(%arg0: i32, %arg1: i32) -> (i32, i32) {
    %c0_i32 = arith.constant 0 : i32
    return %arg0, %arg1 : i32, i32
  }
}

</mosaic_0001>

<llo_original>
// kernel: tpu_custom_call.1
$region0: #{tpu_custom_call.1}
  #allocation0 [shape = 'u32[]', space=smem, size = 0x4, offset = 0x4, fixed_abs, tag = 'smem constant byte address 0x4 - core index']
  #allocation1 [shape = 'u32[72,128]{1,0:T(1,128)}', space=vmem, size = 0x9000, scoped, tag = 'internal scratch']
  %s0 = inlined_call_operand.hbm [shape: bf16[1024,128], index: 0, kind: input, shape index: {}]
  %s1 = inlined_call_operand.vmem [shape: bf16[128,80], index: 1, kind: input, shape index: {}]
  %s2 = inlined_call_operand.vmem [shape: f32[1,80], index: 2, kind: input, shape index: {}]
  %s3 = inlined_call_operand.vmem [shape: f32[1024,80], index: 3, kind: output, shape index: {}]
  %s4 = sld [smem:[#allocation0]]
  $region49: #{tpu_custom_call.1} parent=0
    _
  %s6 = ssub.s32 1, %s4
  %s7 = scalar_select 0, %s6, %s4
  $region1: #{tpu_custom_call.1} parent=0
    #allocation2 [shape = 'u8[262144]{0}', space=vmem, size = 0x40000, scoped, tag = 'input window, operand 0']
    #allocation3 [shape = 's32[2]{0}', space=sflag, size = 0x8, scoped, tag = 'scoped memory for tpu_custom_call.1']
    %8 = vsyncpa [#allocation3], 0
    %s9 = scalar_lea.sflag [#allocation3], 1
    %10 = vsyncpa %s9, 0
    loop: start=0, step=1, limit=4
    $region2: #{tpu_custom_call.1} parent=1 // loop_pre_header
      _
    $region3: #{tpu_custom_call.1} parent=1 // loop_header
      %s12 = sphi 0, %s16
      %p13 = scmp.ge.s32.totalorder %s12, 4
      %s19 = sphi 0, %s31
      %s20 = sphi 0, %s27
      %s21 = sphi 0, %s19
      %s22 = sphi 0, %s20
      %s23 = sphi 0, %s21
      %s24 = sphi 0, %s22
      %s34 = sphi 0, %s36
      %s37 = sphi 0, %s34
      %s38 = sphi 0, %s37
      %s54 = sphi 0, %s38
      %s60 = sphi 0, %s62
      %s63 = sphi 0, %s60
      %s64 = sphi 0, %s63
      %s80 = sphi 0, %s64
      %s86 = sphi 0, %s88
      %s89 = sphi 0, %s86
      %s90 = sphi 0, %s89
      %s106 = sphi 0, %s90
      %s114 = sphi 0, %s116
      %s117 = sphi 0, %s114
      %s118 = sphi 0, %s117
      %s134 = sphi 0, %s118
    $region4: #{tpu_custom_call.1} parent=1 // loop_header_branch
      %15 = sbr.rel (%p13) target = $region8
    $region5: #{tpu_custom_call.1} parent=1 // loop_body
      %s17 = ssub.s32 %s12, 1
      %s18 = ssub.s32 %s12, 2
      %s25 = sadd.s32 1, %s20
      %p26 = scmp.ge.s32.totalorder %s25, 1
      %s27 = scalar_select %p26, 0, %s25
      %s28 = sadd.s32 1, %s19
      %s29 = scalar_select %p26, %s28, %s19
      %p30 = scmp.ge.s32.totalorder %s29, 2
      %s31 = scalar_select %p30, 0, %s29
      %s32 = ssub.s32 %s19, %s31
      %p33 = scmp.eq.s32.totalorder %s32, 0
      %s35 = sadd.s32 %s34, 1
      %s36 = scalar_select %p33, %s34, %s35
      %p39 = pneg %p33
      %p40 = scmp.eq.s32.totalorder %s12, 1
      %p41 = por %p39, %p40
      %p42 = scmp.ne.s32.totalorder %s34, %s37
      %p43 = scmp.eq.s32.totalorder %s12, 0
      %p44 = por %p42, %p43
      %p45 = scmp.ne.s32.totalorder %s34, %s37
      %p46 = scmp.eq.s32.totalorder %s17, 1
      %p47 = por %p45, %p46
      %p48 = scmp.ne.s32.totalorder %s37, %s38
      %p49 = scmp.eq.s32.totalorder %s17, 0
      %p50 = por %p48, %p49
      %p51 = scmp.ne.s32.totalorder %s37, %s38
      %p52 = scmp.eq.s32.totalorder %s18, 1
      %p53 = por %p51, %p52
      %p55 = scmp.ne.s32.totalorder %s38, %s54
      %p56 = scmp.eq.s32.totalorder %s18, 0
      %p57 = por %p55, %p56
      %s58 = ssub.s32 %s20, %s27
      %p59 = scmp.eq.s32.totalorder %s58, 0
      %s61 = sadd.s32 %s60, 1
      %s62 = scalar_select %p59, %s60, %s61
      %p65 = pneg %p59
      %p66 = scmp.eq.s32.totalorder %s12, 1
      %p67 = por %p65, %p66
      %p68 = scmp.ne.s32.totalorder %s60, %s63
      %p69 = scmp.eq.s32.totalorder %s12, 0
      %p70 = por %p68, %p69
      %p71 = scmp.ne.s32.totalorder %s60, %s63
      %p72 = scmp.eq.s32.totalorder %s17, 1
      %p73 = por %p71, %p72
      %p74 = scmp.ne.s32.totalorder %s63, %s64
      %p75 = scmp.eq.s32.totalorder %s17, 0
      %p76 = por %p74, %p75
      %p77 = scmp.ne.s32.totalorder %s63, %s64
      %p78 = scmp.eq.s32.totalorder %s18, 1
      %p79 = por %p77, %p78
      %p81 = scmp.ne.s32.totalorder %s64, %s80
      %p82 = scmp.eq.s32.totalorder %s18, 0
      %p83 = por %p81, %p82
      %s84 = ssub.s32 %s20, %s27
      %p85 = scmp.eq.s32.totalorder %s84, 0
      %s87 = sadd.s32 %s86, 1
      %s88 = scalar_select %p85, %s86, %s87
      %p91 = pneg %p85
      %p92 = scmp.eq.s32.totalorder %s12, 1
      %p93 = por %p91, %p92
      %p94 = scmp.ne.s32.totalorder %s86, %s89
      %p95 = scmp.eq.s32.totalorder %s12, 0
      %p96 = por %p94, %p95
      %p97 = scmp.ne.s32.totalorder %s86, %s89
      %p98 = scmp.eq.s32.totalorder %s17, 1
      %p99 = por %p97, %p98
      %p100 = scmp.ne.s32.totalorder %s89, %s90
      %p101 = scmp.eq.s32.totalorder %s17, 0
      %p102 = por %p100, %p101
      %p103 = scmp.ne.s32.totalorder %s89, %s90
      %p104 = scmp.eq.s32.totalorder %s18, 1
      %p105 = por %p103, %p104
      %p107 = scmp.ne.s32.totalorder %s90, %s106
      %p108 = scmp.eq.s32.totalorder %s18, 0
      %p109 = por %p107, %p108
      %s110 = ssub.s32 %s19, %s31
      %s111 = ssub.s32 %s20, %s27
      %s112 = sor.u32 %s110, %s111
      %p113 = scmp.eq.s32.totalorder %s112, 0
      %s115 = sadd.s32 %s114, 1
      %s116 = scalar_select %p113, %s114, %s115
      %p119 = pneg %p113
      %p120 = scmp.eq.s32.totalorder %s12, 1
      %p121 = por %p119, %p120
      %p122 = scmp.ne.s32.totalorder %s114, %s117
      %p123 = scmp.eq.s32.totalorder %s12, 0
      %p124 = por %p122, %p123
      %p125 = scmp.ne.s32.totalorder %s114, %s117
      %p126 = scmp.eq.s32.totalorder %s17, 1
      %p127 = por %p125, %p126
      %p128 = scmp.ne.s32.totalorder %s117, %s118
      %p129 = scmp.eq.s32.totalorder %s17, 0
      %p130 = por %p128, %p129
      %p131 = scmp.ne.s32.totalorder %s117, %s118
      %p132 = scmp.eq.s32.totalorder %s18, 1
      %p133 = por %p131, %p132
      %p135 = scmp.ne.s32.totalorder %s118, %s134
      %p136 = scmp.eq.s32.totalorder %s18, 0
      %p137 = por %p135, %p136
      %p138 = scmp.le.s32.totalorder 1, %s12
      %p139 = scmp.lt.s32.totalorder %s12, 3
      %p140 = pnand %p138, %p139
      %p141 = pneg %p140
      // Predicated region
      $region9: #{tpu_custom_call.1} parent=5 // pred_check
        _
      $region10: #{tpu_custom_call.1} parent=5 // pred_check_branch
        %143 = sbr.rel (%p140) target = $region12
      $region11: #{tpu_custom_call.1} parent=5 // pred_region
        %s144 = ssub.s32 %s12, 1
        // Predicated region
        $region13: #{tpu_custom_call.1} parent=11 // pred_check
          %p145 = pneg %p76
        $region14: #{tpu_custom_call.1} parent=11 // pred_check_branch
          %147 = sbr.rel (%p145) target = $region16
        $region15: #{tpu_custom_call.1} parent=11 // pred_region
          %p148 = scmp.lt.s32.totalorder %s22, 0
          %s149 = scalar_select %p148, %s22, 0
          %s150 = smul.addr %s149, 4
          %s151 = scalar_lea.vmem %s1, %s150
        $region16: #{tpu_custom_call.1} parent=11 // pred_fallthru
          _
        // Predicated region
        $region17: #{tpu_custom_call.1} parent=11 // pred_check
          %p152 = pneg %p102
        $region18: #{tpu_custom_call.1} parent=11 // pred_check_branch
          %154 = sbr.rel (%p152) target = $region20
        $region19: #{tpu_custom_call.1} parent=11 // pred_region
          %p155 = scmp.lt.s32.totalorder %s22, 0
          %s156 = scalar_select %p155, %s22, 0
          %s157 = scalar_lea.vmem %s2, %s156
        $region20: #{tpu_custom_call.1} parent=11 // pred_fallthru
          _
      $region12: #{tpu_custom_call.1} parent=5 // pred_fallthru
        _
      %p158 = scmp.lt.s32.totalorder %s12, 2
      // Predicated region
      $region21: #{tpu_custom_call.1} parent=5 // pred_check
        %p159 = pneg %p158
      $region22: #{tpu_custom_call.1} parent=5 // pred_check_branch
        %161 = sbr.rel (%p159) target = $region24
      $region23: #{tpu_custom_call.1} parent=5 // pred_region
        // Predicated region
        $region25: #{tpu_custom_call.1} parent=23 // pred_check
          %p162 = pneg %p44
        $region26: #{tpu_custom_call.1} parent=23 // pred_check_branch
          %164 = sbr.rel (%p162) target = $region28
        $region27: #{tpu_custom_call.1} parent=23 // pred_region
          %s165 = sand.u32 %s34, 1
          %s166 = scalar_lea.sflag [#allocation3], %s165
          %s167 = sand.u32 %s34, 1
          %s168 = smul.addr %s167, 256
          %s169 = scalar_lea.vmem [#allocation2], %s168
          %s170 = smul.u32 64, %s19
          %172 = vsyncadd %s166, 0
          %s173 = smul.addr %s170, 4
          %s174 = scalar_lea.hbm %s0, %s173
          %s175 = sshll.u32 %s174, 4
          %s176 = int_to_ptr.hbm [resolvable:$true] %s175
          %s177 = sshll.u32 %s169, 4
          %s178 = int_to_ptr.vmem [resolvable:$true] %s177
          %183 = dma.hbm_to_vmem [thread:$0]  %s176, 4096, %s178, %s166, 64, 64, 4
        $region28: #{tpu_custom_call.1} parent=23 // pred_fallthru
          _
      $region24: #{tpu_custom_call.1} parent=5 // pred_fallthru
        _
      %p184 = scmp.le.s32.totalorder 1, %s12
      %p185 = scmp.lt.s32.totalorder %s12, 3
      %p186 = pnand %p184, %p185
      %p187 = pneg %p186
      // Predicated region
      $region29: #{tpu_custom_call.1} parent=5 // pred_check
        _
      $region30: #{tpu_custom_call.1} parent=5 // pred_check_branch
        %189 = sbr.rel (%p186) target = $region32
      $region31: #{tpu_custom_call.1} parent=5 // pred_region
        %s190 = ssub.s32 %s12, 1
        %s191 = sand.u32 %s37, 1
        %s192 = scalar_lea.sflag [#allocation3], %s191
        %s193 = sand.u32 %s37, 1
        %s194 = smul.addr %s193, 256
        %s195 = scalar_lea.vmem [#allocation2], %s194
        // Predicated region
        $region33: #{tpu_custom_call.1} parent=31 // pred_check
          %p196 = pneg %p50
        $region34: #{tpu_custom_call.1} parent=31 // pred_check_branch
          %198 = sbr.rel (%p196) target = $region36
        $region35: #{tpu_custom_call.1} parent=31 // pred_region
          %200 = dma.done %s192, 4096
        $region36: #{tpu_custom_call.1} parent=31 // pred_fallthru
          _
        %s201 = sand.u32 %s37, 1
        %s202 = scalar_lea.sflag [#allocation3], %s201
        %s203 = sand.u32 %s37, 1
        %s204 = smul.addr %s203, 256
        %s205 = scalar_lea.vmem [#allocation2], %s204
        %p206 = pneg %p50
        %p207 = pneg %p47
        %p208 = scmp.lt.s32.totalorder %s22, 0
        %s209 = scalar_select %p208, %s22, 0
        %s210 = smul.addr %s209, 4
        %s211 = scalar_lea.vmem %s1, %s210
        %p212 = pneg %p76
        %p213 = pneg %p73
        %p214 = scmp.lt.s32.totalorder %s22, 0
        %s215 = scalar_select %p214, %s22, 0
        %s216 = scalar_lea.vmem %s2, %s215
        %p217 = pneg %p102
        %p218 = pneg %p99
        %p219 = pneg %p130
        %p220 = pneg %p127
        %s221 = smul.u32 64, %s21
        %p222 = scmp.lt.s32.totalorder %s221, 127
        %s223 = scalar_select %p222, %s221, 127
        %p224 = scmp.lt.s32.totalorder %s22, 0
        %s225 = scalar_select %p224, %s22, 0
        %s226 = sadd.s32 %s225, %s223
        %s227 = smul.addr %s226, 8
        %s228 = scalar_lea.vmem %s3, %s227
        %s229 = smul.u32 64, %s21
        %p230 = scmp.lt.s32.totalorder %s22, 0
        %s231 = scalar_select %p230, %s22, 0
        %s232 = smul.addr %s231, 4
        %s233 = scalar_lea.vmem %s1, %s232
        %p234 = scmp.lt.s32.totalorder %s22, 0
        %s235 = scalar_select %p234, %s22, 0
        %s236 = scalar_lea.vmem %s2, %s235
        %s237 = smul.u32 64, %s21
        %p238 = scmp.lt.s32.totalorder %s237, 127
        %s239 = scalar_select %p238, %s237, 127
        %p240 = scmp.lt.s32.totalorder %s22, 0
        %s241 = scalar_select %p240, %s22, 0
        %s242 = sadd.s32 %s241, %s239
        %s243 = smul.addr %s242, 8
        %s244 = scalar_lea.vmem %s3, %s243
        %s245 = smul.u32 64, %s21
        %v246 = vld [vmem:[%s195] sm:$0xf]
        %v247 = vld [vmem:[%s195 + $0x4] sm:$0xf]
        %v248 = vld [vmem:[%s195 + $0x8] sm:$0xf]
        %v249 = vld [vmem:[%s195 + $0xc] sm:$0xf]
        %v250 = vld [vmem:[%s195 + $0x10] sm:$0xf]
        %v251 = vld [vmem:[%s195 + $0x14] sm:$0xf]
        %v252 = vld [vmem:[%s195 + $0x18] sm:$0xf]
        %v253 = vld [vmem:[%s195 + $0x1c] sm:$0xf]
        %v254 = vld [vmem:[%s195 + $0x20] sm:$0xf]
        %v255 = vld [vmem:[%s195 + $0x24] sm:$0xf]
        %v256 = vld [vmem:[%s195 + $0x28] sm:$0xf]
        %v257 = vld [vmem:[%s195 + $0x2c] sm:$0xf]
        %v258 = vld [vmem:[%s195 + $0x30] sm:$0xf]
        %v259 = vld [vmem:[%s195 + $0x34] sm:$0xf]
        %v260 = vld [vmem:[%s195 + $0x38] sm:$0xf]
        %v261 = vld [vmem:[%s195 + $0x3c] sm:$0xf]
        %v262 = vld [vmem:[%s195 + $0x40] sm:$0xf]
        %v263 = vld [vmem:[%s195 + $0x44] sm:$0xf]
        %v264 = vld [vmem:[%s195 + $0x48] sm:$0xf]
        %v265 = vld [vmem:[%s195 + $0x4c] sm:$0xf]
        %v266 = vld [vmem:[%s195 + $0x50] sm:$0xf]
        %v267 = vld [vmem:[%s195 + $0x54] sm:$0xf]
        %v268 = vld [vmem:[%s195 + $0x58] sm:$0xf]
        %v269 = vld [vmem:[%s195 + $0x5c] sm:$0xf]
        %v270 = vld [vmem:[%s195 + $0x60] sm:$0xf]
        %v271 = vld [vmem:[%s195 + $0x64] sm:$0xf]
        %v272 = vld [vmem:[%s195 + $0x68] sm:$0xf]
        %v273 = vld [vmem:[%s195 + $0x6c] sm:$0xf]
        %v274 = vld [vmem:[%s195 + $0x70] sm:$0xf]
        %v275 = vld [vmem:[%s195 + $0x74] sm:$0xf]
        %v276 = vld [vmem:[%s195 + $0x78] sm:$0xf]
        %v277 = vld [vmem:[%s195 + $0x7c] sm:$0xf]
        %v278 = vld [vmem:[%s195 + $0x80] sm:$0xf]
        %v279 = vld [vmem:[%s195 + $0x84] sm:$0xf]
        %v280 = vld [vmem:[%s195 + $0x88] sm:$0xf]
        %v281 = vld [vmem:[%s195 + $0x8c] sm:$0xf]
        %v282 = vld [vmem:[%s195 + $0x90] sm:$0xf]
        %v283 = vld [vmem:[%s195 + $0x94] sm:$0xf]
        %v284 = vld [vmem:[%s195 + $0x98] sm:$0xf]
        %v285 = vld [vmem:[%s195 + $0x9c] sm:$0xf]
        %v286 = vld [vmem:[%s195 + $0xa0] sm:$0xf]
        %v287 = vld [vmem:[%s195 + $0xa4] sm:$0xf]
        %v288 = vld [vmem:[%s195 + $0xa8] sm:$0xf]
        %v289 = vld [vmem:[%s195 + $0xac] sm:$0xf]
        %v290 = vld [vmem:[%s195 + $0xb0] sm:$0xf]
        %v291 = vld [vmem:[%s195 + $0xb4] sm:$0xf]
        %v292 = vld [vmem:[%s195 + $0xb8] sm:$0xf]
        %v293 = vld [vmem:[%s195 + $0xbc] sm:$0xf]
        %v294 = vld [vmem:[%s195 + $0xc0] sm:$0xf]
        %v295 = vld [vmem:[%s195 + $0xc4] sm:$0xf]
        %v296 = vld [vmem:[%s195 + $0xc8] sm:$0xf]
        %v297 = vld [vmem:[%s195 + $0xcc] sm:$0xf]
        %v298 = vld [vmem:[%s195 + $0xd0] sm:$0xf]
        %v299 = vld [vmem:[%s195 + $0xd4] sm:$0xf]
        %v300 = vld [vmem:[%s195 + $0xd8] sm:$0xf]
        %v301 = vld [vmem:[%s195 + $0xdc] sm:$0xf]
        %v302 = vld [vmem:[%s195 + $0xe0] sm:$0xf]
        %v303 = vld [vmem:[%s195 + $0xe4] sm:$0xf]
        %v304 = vld [vmem:[%s195 + $0xe8] sm:$0xf]
        %v305 = vld [vmem:[%s195 + $0xec] sm:$0xf]
        %v306 = vld [vmem:[%s195 + $0xf0] sm:$0xf]
        %v307 = vld [vmem:[%s195 + $0xf4] sm:$0xf]
        %v308 = vld [vmem:[%s195 + $0xf8] sm:$0xf]
        %v309 = vld [vmem:[%s195 + $0xfc] sm:$0xf]
        %v310 = vld [vmem:[%s233] sm:$0xf]
        %v311 = vld [vmem:[%s233 + $0x4] sm:$0xf]
        %v312 = vld [vmem:[%s233 + $0x8] sm:$0xf]
        %v313 = vld [vmem:[%s233 + $0xc] sm:$0xf]
        %v314 = vld [vmem:[%s233 + $0x10] sm:$0xf]
        %v315 = vld [vmem:[%s233 + $0x14] sm:$0xf]
        %v316 = vld [vmem:[%s233 + $0x18] sm:$0xf]
        %v317 = vld [vmem:[%s233 + $0x1c] sm:$0xf]
        %v318 = vld [vmem:[%s233 + $0x20] sm:$0xf]
        %v319 = vld [vmem:[%s233 + $0x24] sm:$0xf]
        %v320 = vld [vmem:[%s233 + $0x28] sm:$0xf]
        %v321 = vld [vmem:[%s233 + $0x2c] sm:$0xf]
        %v322 = vld [vmem:[%s233 + $0x30] sm:$0xf]
        %v323 = vld [vmem:[%s233 + $0x34] sm:$0xf]
        %v324 = vld [vmem:[%s233 + $0x38] sm:$0xf]
        %v325 = vld [vmem:[%s233 + $0x3c] sm:$0xf]
        %v326 = vld [vmem:[%s236] sm:$0x1]
        %v328 = vperm.slane %v326, 0
        %v394 = vunpack.c.l.b16 %v246
        %v395 = vunpack.c.l.b16 %v247
        %v396 = vunpack.c.l.b16 %v248
        %v397 = vunpack.c.l.b16 %v249
        %v398 = vunpack.c.l.b16 %v250
        %v399 = vunpack.c.l.b16 %v251
        %v400 = vunpack.c.l.b16 %v252
        %v401 = vunpack.c.l.b16 %v253
        %v402 = vunpack.c.l.b16 %v254
        %v403 = vunpack.c.l.b16 %v255
        %v404 = vunpack.c.l.b16 %v256
        %v405 = vunpack.c.l.b16 %v257
        %v406 = vunpack.c.l.b16 %v258
        %v407 = vunpack.c.l.b16 %v259
        %v408 = vunpack.c.l.b16 %v260
        %v409 = vunpack.c.l.b16 %v261
        %v410 = vunpack.c.l.b16 %v262
        %v411 = vunpack.c.l.b16 %v263
        %v412 = vunpack.c.l.b16 %v264
        %v413 = vunpack.c.l.b16 %v265
        %v414 = vunpack.c.l.b16 %v266
        %v415 = vunpack.c.l.b16 %v267
        %v416 = vunpack.c.l.b16 %v268
        %v417 = vunpack.c.l.b16 %v269
        %v418 = vunpack.c.l.b16 %v270
        %v419 = vunpack.c.l.b16 %v271
        %v420 = vunpack.c.l.b16 %v272
        %v421 = vunpack.c.l.b16 %v273
        %v422 = vunpack.c.l.b16 %v274
        %v423 = vunpack.c.l.b16 %v275
        %v424 = vunpack.c.l.b16 %v276
        %v425 = vunpack.c.l.b16 %v277
        %v426 = vunpack.c.l.b16 %v278
        %v427 = vunpack.c.l.b16 %v279
        %v428 = vunpack.c.l.b16 %v280
        %v429 = vunpack.c.l.b16 %v281
        %v430 = vunpack.c.l.b16 %v282
        %v431 = vunpack.c.l.b16 %v283
        %v432 = vunpack.c.l.b16 %v284
        %v433 = vunpack.c.l.b16 %v285
        %v434 = vunpack.c.l.b16 %v286
        %v435 = vunpack.c.l.b16 %v287
        %v436 = vunpack.c.l.b16 %v288
        %v437 = vunpack.c.l.b16 %v289
        %v438 = vunpack.c.l.b16 %v290
        %v439 = vunpack.c.l.b16 %v291
        %v440 = vunpack.c.l.b16 %v292
        %v441 = vunpack.c.l.b16 %v293
        %v442 = vunpack.c.l.b16 %v294
        %v443 = vunpack.c.l.b16 %v295
        %v444 = vunpack.c.l.b16 %v296
        %v445 = vunpack.c.l.b16 %v297
        %v446 = vunpack.c.l.b16 %v298
        %v447 = vunpack.c.l.b16 %v299
        %v448 = vunpack.c.l.b16 %v300
        %v449 = vunpack.c.l.b16 %v301
        %v450 = vunpack.c.l.b16 %v302
        %v451 = vunpack.c.l.b16 %v303
        %v452 = vunpack.c.l.b16 %v304
        %v453 = vunpack.c.l.b16 %v305
        %v454 = vunpack.c.l.b16 %v306
        %v455 = vunpack.c.l.b16 %v307
        %v456 = vunpack.c.l.b16 %v308
        %v457 = vunpack.c.l.b16 %v309
        %v458 = vpack.c.b16 %v395, %v394
        %v459 = vpack.c.b16 %v397, %v396
        %v460 = vpack.c.b16 %v399, %v398
        %v461 = vpack.c.b16 %v401, %v400
        %v462 = vpack.c.b16 %v403, %v402
        %v463 = vpack.c.b16 %v405, %v404
        %v464 = vpack.c.b16 %v407, %v406
        %v465 = vpack.c.b16 %v409, %v408
        %v466 = vpack.c.b16 %v411, %v410
        %v467 = vpack.c.b16 %v413, %v412
        %v468 = vpack.c.b16 %v415, %v414
        %v469 = vpack.c.b16 %v417, %v416
        %v470 = vpack.c.b16 %v419, %v418
        %v471 = vpack.c.b16 %v421, %v420
        %v472 = vpack.c.b16 %v423, %v422
        %v473 = vpack.c.b16 %v425, %v424
        %v474 = vpack.c.b16 %v427, %v426
        %v475 = vpack.c.b16 %v429, %v428
        %v476 = vpack.c.b16 %v431, %v430
        %v477 = vpack.c.b16 %v433, %v432
        %v478 = vpack.c.b16 %v435, %v434
        %v479 = vpack.c.b16 %v437, %v436
        %v480 = vpack.c.b16 %v439, %v438
        %v481 = vpack.c.b16 %v441, %v440
        %v482 = vpack.c.b16 %v443, %v442
        %v483 = vpack.c.b16 %v445, %v444
        %v484 = vpack.c.b16 %v447, %v446
        %v485 = vpack.c.b16 %v449, %v448
        %v486 = vpack.c.b16 %v451, %v450
        %v487 = vpack.c.b16 %v453, %v452
        %v488 = vpack.c.b16 %v455, %v454
        %v489 = vpack.c.b16 %v457, %v456
        %v538 = vunpack.c.l.b16 %v310
        %v539 = vunpack.c.l.b16 %v311
        %v540 = vunpack.c.l.b16 %v312
        %v541 = vunpack.c.l.b16 %v313
        %v542 = vunpack.c.l.b16 %v314
        %v543 = vunpack.c.l.b16 %v315
        %v544 = vunpack.c.l.b16 %v316
        %v545 = vunpack.c.l.b16 %v317
        %v546 = vunpack.c.l.b16 %v318
        %v547 = vunpack.c.l.b16 %v319
        %v548 = vunpack.c.l.b16 %v320
        %v549 = vunpack.c.l.b16 %v321
        %v550 = vunpack.c.l.b16 %v322
        %v551 = vunpack.c.l.b16 %v323
        %v552 = vunpack.c.l.b16 %v324
        %v553 = vunpack.c.l.b16 %v325
        %v554 = vpack.c.b16 %v539, %v538
        %v555 = vpack.c.b16 %v541, %v540
        %v556 = vpack.c.b16 %v543, %v542
        %v557 = vpack.c.b16 %v545, %v544
        %v558 = vpack.c.b16 %v547, %v546
        %v559 = vpack.c.b16 %v549, %v548
        %v560 = vpack.c.b16 %v551, %v550
        %v561 = vpack.c.b16 %v553, %v552
        %570 = vmatpush.bf16.msra.mxu0 %v561
        %571 = vmatpush.bf16.msra.mxu0 %v560
        %572 = vmatpush.bf16.msra.mxu0 %v559
        %573 = vmatpush.bf16.msra.mxu0 %v558
        %574 = vmatpush.bf16.msra.mxu0 %v557
        %575 = vmatpush.bf16.msra.mxu0 %v556
        %576 = vmatpush.bf16.msra.mxu0 %v555
        %577 = vmatpush.bf16.msra.mxu0 %v554
        %578 = vmatmul.bf16.gmra.mxu0 %v458
        %v579 = vpop.f32.mrf.mxu0
        %v580 = vadd.f32 %v328, %v579
        %v581 = vpop.f32.mrf.mxu0
        %v582 = vadd.f32 %v328, %v581
        %583 = vmatmul.bf16.gmra.mxu0 %v459
        %v584 = vpop.f32.mrf.mxu0
        %v585 = vadd.f32 %v328, %v584
        %v586 = vpop.f32.mrf.mxu0
        %v587 = vadd.f32 %v328, %v586
        %588 = vmatmul.bf16.gmra.mxu0 %v460
        %v589 = vpop.f32.mrf.mxu0
        %v590 = vadd.f32 %v328, %v589
        %v591 = vpop.f32.mrf.mxu0
        %v592 = vadd.f32 %v328, %v591
        %593 = vmatmul.bf16.gmra.mxu0 %v461
        %v594 = vpop.f32.mrf.mxu0
        %v595 = vadd.f32 %v328, %v594
        %v596 = vpop.f32.mrf.mxu0
        %v597 = vadd.f32 %v328, %v596
        %598 = vmatmul.bf16.gmra.mxu0 %v462
        %v599 = vpop.f32.mrf.mxu0
        %v600 = vadd.f32 %v328, %v599
        %v601 = vpop.f32.mrf.mxu0
        %v602 = vadd.f32 %v328, %v601
        %603 = vmatmul.bf16.gmra.mxu0 %v463
        %v604 = vpop.f32.mrf.mxu0
        %v605 = vadd.f32 %v328, %v604
        %v606 = vpop.f32.mrf.mxu0
        %v607 = vadd.f32 %v328, %v606
        %608 = vmatmul.bf16.gmra.mxu0 %v464
        %v609 = vpop.f32.mrf.mxu0
        %v610 = vadd.f32 %v328, %v609
        %v611 = vpop.f32.mrf.mxu0
        %v612 = vadd.f32 %v328, %v611
        %613 = vmatmul.bf16.gmra.mxu0 %v465
        %v614 = vpop.f32.mrf.mxu0
        %v615 = vadd.f32 %v328, %v614
        %v616 = vpop.f32.mrf.mxu0
        %v617 = vadd.f32 %v328, %v616
        %618 = vmatmul.bf16.gmra.mxu0 %v466
        %v619 = vpop.f32.mrf.mxu0
        %v620 = vadd.f32 %v328, %v619
        %v621 = vpop.f32.mrf.mxu0
        %v622 = vadd.f32 %v328, %v621
        %623 = vmatmul.bf16.gmra.mxu0 %v467
        %v624 = vpop.f32.mrf.mxu0
        %v625 = vadd.f32 %v328, %v624
        %v626 = vpop.f32.mrf.mxu0
        %v627 = vadd.f32 %v328, %v626
        %628 = vmatmul.bf16.gmra.mxu0 %v468
        %v629 = vpop.f32.mrf.mxu0
        %v630 = vadd.f32 %v328, %v629
        %v631 = vpop.f32.mrf.mxu0
        %v632 = vadd.f32 %v328, %v631
        %633 = vmatmul.bf16.gmra.mxu0 %v469
        %v634 = vpop.f32.mrf.mxu0
        %v635 = vadd.f32 %v328, %v634
        %v636 = vpop.f32.mrf.mxu0
        %v637 = vadd.f32 %v328, %v636
        %638 = vmatmul.bf16.gmra.mxu0 %v470
        %v639 = vpop.f32.mrf.mxu0
        %v640 = vadd.f32 %v328, %v639
        %v641 = vpop.f32.mrf.mxu0
        %v642 = vadd.f32 %v328, %v641
        %643 = vmatmul.bf16.gmra.mxu0 %v471
        %v644 = vpop.f32.mrf.mxu0
        %v645 = vadd.f32 %v328, %v644
        %v646 = vpop.f32.mrf.mxu0
        %v647 = vadd.f32 %v328, %v646
        %648 = vmatmul.bf16.gmra.mxu0 %v472
        %v649 = vpop.f32.mrf.mxu0
        %v650 = vadd.f32 %v328, %v649
        %v651 = vpop.f32.mrf.mxu0
        %v652 = vadd.f32 %v328, %v651
        %653 = vmatmul.bf16.gmra.mxu0 %v473
        %v654 = vpop.f32.mrf.mxu0
        %v655 = vadd.f32 %v328, %v654
        %v656 = vpop.f32.mrf.mxu0
        %v657 = vadd.f32 %v328, %v656
        %658 = vmatmul.bf16.gmra.mxu0 %v474
        %v659 = vpop.f32.mrf.mxu0
        %v660 = vadd.f32 %v328, %v659
        %v661 = vpop.f32.mrf.mxu0
        %v662 = vadd.f32 %v328, %v661
        %663 = vmatmul.bf16.gmra.mxu0 %v475
        %v664 = vpop.f32.mrf.mxu0
        %v665 = vadd.f32 %v328, %v664
        %v666 = vpop.f32.mrf.mxu0
        %v667 = vadd.f32 %v328, %v666
        %668 = vmatmul.bf16.gmra.mxu0 %v476
        %v669 = vpop.f32.mrf.mxu0
        %v670 = vadd.f32 %v328, %v669
        %v671 = vpop.f32.mrf.mxu0
        %v672 = vadd.f32 %v328, %v671
        %673 = vmatmul.bf16.gmra.mxu0 %v477
        %v674 = vpop.f32.mrf.mxu0
        %v675 = vadd.f32 %v328, %v674
        %v676 = vpop.f32.mrf.mxu0
        %v677 = vadd.f32 %v328, %v676
        %678 = vmatmul.bf16.gmra.mxu0 %v478
        %v679 = vpop.f32.mrf.mxu0
        %v680 = vadd.f32 %v328, %v679
        %v681 = vpop.f32.mrf.mxu0
        %v682 = vadd.f32 %v328, %v681
        %683 = vmatmul.bf16.gmra.mxu0 %v479
        %v684 = vpop.f32.mrf.mxu0
        %v685 = vadd.f32 %v328, %v684
        %v686 = vpop.f32.mrf.mxu0
        %v687 = vadd.f32 %v328, %v686
        %688 = vmatmul.bf16.gmra.mxu0 %v480
        %v689 = vpop.f32.mrf.mxu0
        %v690 = vadd.f32 %v328, %v689
        %v691 = vpop.f32.mrf.mxu0
        %v692 = vadd.f32 %v328, %v691
        %693 = vmatmul.bf16.gmra.mxu0 %v481
        %v694 = vpop.f32.mrf.mxu0
        %v695 = vadd.f32 %v328, %v694
        %v696 = vpop.f32.mrf.mxu0
        %v697 = vadd.f32 %v328, %v696
        %698 = vmatmul.bf16.gmra.mxu0 %v482
        %v699 = vpop.f32.mrf.mxu0
        %v700 = vadd.f32 %v328, %v699
        %v701 = vpop.f32.mrf.mxu0
        %v702 = vadd.f32 %v328, %v701
        %703 = vmatmul.bf16.gmra.mxu0 %v483
        %v704 = vpop.f32.mrf.mxu0
        %v705 = vadd.f32 %v328, %v704
        %v706 = vpop.f32.mrf.mxu0
        %v707 = vadd.f32 %v328, %v706
        %708 = vmatmul.bf16.gmra.mxu0 %v484
        %v709 = vpop.f32.mrf.mxu0
        %v710 = vadd.f32 %v328, %v709
        %v711 = vpop.f32.mrf.mxu0
        %v712 = vadd.f32 %v328, %v711
        %713 = vmatmul.bf16.gmra.mxu0 %v485
        %v714 = vpop.f32.mrf.mxu0
        %v715 = vadd.f32 %v328, %v714
        %v716 = vpop.f32.mrf.mxu0
        %v717 = vadd.f32 %v328, %v716
        %718 = vmatmul.bf16.gmra.mxu0 %v486
        %v719 = vpop.f32.mrf.mxu0
        %v720 = vadd.f32 %v328, %v719
        %v721 = vpop.f32.mrf.mxu0
        %v722 = vadd.f32 %v328, %v721
        %723 = vmatmul.bf16.gmra.mxu0 %v487
        %v724 = vpop.f32.mrf.mxu0
        %v725 = vadd.f32 %v328, %v724
        %v726 = vpop.f32.mrf.mxu0
        %v727 = vadd.f32 %v328, %v726
        %728 = vmatmul.bf16.gmra.mxu0 %v488
        %v729 = vpop.f32.mrf.mxu0
        %v730 = vadd.f32 %v328, %v729
        %v731 = vpop.f32.mrf.mxu0
        %v732 = vadd.f32 %v328, %v731
        %733 = vmatmul.bf16.gmra.mxu0 %v489
        %v734 = vpop.f32.mrf.mxu0
        %v735 = vadd.f32 %v328, %v734
        %v736 = vpop.f32.mrf.mxu0
        %v737 = vadd.f32 %v328, %v736
        %738 = vdwg.mxu0
        %v739 = vadd.f32 %v580, 3.0
        %v740 = vadd.f32 %v582, 3.0
        %v741 = vadd.f32 %v585, 3.0
        %v742 = vadd.f32 %v587, 3.0
        %v743 = vadd.f32 %v590, 3.0
        %v744 = vadd.f32 %v592, 3.0
        %v745 = vadd.f32 %v595, 3.0
        %v746 = vadd.f32 %v597, 3.0
        %v747 = vadd.f32 %v600, 3.0
        %v748 = vadd.f32 %v602, 3.0
        %v749 = vadd.f32 %v605, 3.0
        %v750 = vadd.f32 %v607, 3.0
        %v751 = vadd.f32 %v610, 3.0
        %v752 = vadd.f32 %v612, 3.0
        %v753 = vadd.f32 %v615, 3.0
        %v754 = vadd.f32 %v617, 3.0
        %v755 = vadd.f32 %v620, 3.0
        %v756 = vadd.f32 %v622, 3.0
        %v757 = vadd.f32 %v625, 3.0
        %v758 = vadd.f32 %v627, 3.0
        %v759 = vadd.f32 %v630, 3.0
        %v760 = vadd.f32 %v632, 3.0
        %v761 = vadd.f32 %v635, 3.0
        %v762 = vadd.f32 %v637, 3.0
        %v763 = vadd.f32 %v640, 3.0
        %v764 = vadd.f32 %v642, 3.0
        %v765 = vadd.f32 %v645, 3.0
        %v766 = vadd.f32 %v647, 3.0
        %v767 = vadd.f32 %v650, 3.0
        %v768 = vadd.f32 %v652, 3.0
        %v769 = vadd.f32 %v655, 3.0
        %v770 = vadd.f32 %v657, 3.0
        %v771 = vadd.f32 %v660, 3.0
        %v772 = vadd.f32 %v662, 3.0
        %v773 = vadd.f32 %v665, 3.0
        %v774 = vadd.f32 %v667, 3.0
        %v775 = vadd.f32 %v670, 3.0
        %v776 = vadd.f32 %v672, 3.0
        %v777 = vadd.f32 %v675, 3.0
        %v778 = vadd.f32 %v677, 3.0
        %v779 = vadd.f32 %v680, 3.0
        %v780 = vadd.f32 %v682, 3.0
        %v781 = vadd.f32 %v685, 3.0
        %v782 = vadd.f32 %v687, 3.0
        %v783 = vadd.f32 %v690, 3.0
        %v784 = vadd.f32 %v692, 3.0
        %v785 = vadd.f32 %v695, 3.0
        %v786 = vadd.f32 %v697, 3.0
        %v787 = vadd.f32 %v700, 3.0
        %v788 = vadd.f32 %v702, 3.0
        %v789 = vadd.f32 %v705, 3.0
        %v790 = vadd.f32 %v707, 3.0
        %v791 = vadd.f32 %v710, 3.0
        %v792 = vadd.f32 %v712, 3.0
        %v793 = vadd.f32 %v715, 3.0
        %v794 = vadd.f32 %v717, 3.0
        %v795 = vadd.f32 %v720, 3.0
        %v796 = vadd.f32 %v722, 3.0
        %v797 = vadd.f32 %v725, 3.0
        %v798 = vadd.f32 %v727, 3.0
        %v799 = vadd.f32 %v730, 3.0
        %v800 = vadd.f32 %v732, 3.0
        %v801 = vadd.f32 %v735, 3.0
        %v802 = vadd.f32 %v737, 3.0
        %v803 = vmax.f32 %v739, 0.0
        %v804 = vmax.f32 %v740, 0.0
        %v805 = vmax.f32 %v741, 0.0
        %v806 = vmax.f32 %v742, 0.0
        %v807 = vmax.f32 %v743, 0.0
        %v808 = vmax.f32 %v744, 0.0
        %v809 = vmax.f32 %v745, 0.0
        %v810 = vmax.f32 %v746, 0.0
        %v811 = vmax.f32 %v747, 0.0
        %v812 = vmax.f32 %v748, 0.0
        %v813 = vmax.f32 %v749, 0.0
        %v814 = vmax.f32 %v750, 0.0
        %v815 = vmax.f32 %v751, 0.0
        %v816 = vmax.f32 %v752, 0.0
        %v817 = vmax.f32 %v753, 0.0
        %v818 = vmax.f32 %v754, 0.0
        %v819 = vmax.f32 %v755, 0.0
        %v820 = vmax.f32 %v756, 0.0
        %v821 = vmax.f32 %v757, 0.0
        %v822 = vmax.f32 %v758, 0.0
        %v823 = vmax.f32 %v759, 0.0
        %v824 = vmax.f32 %v760, 0.0
        %v825 = vmax.f32 %v761, 0.0
        %v826 = vmax.f32 %v762, 0.0
        %v827 = vmax.f32 %v763, 0.0
        %v828 = vmax.f32 %v764, 0.0
        %v829 = vmax.f32 %v765, 0.0
        %v830 = vmax.f32 %v766, 0.0
        %v831 = vmax.f32 %v767, 0.0
        %v832 = vmax.f32 %v768, 0.0
        %v833 = vmax.f32 %v769, 0.0
        %v834 = vmax.f32 %v770, 0.0
        %v835 = vmax.f32 %v771, 0.0
        %v836 = vmax.f32 %v772, 0.0
        %v837 = vmax.f32 %v773, 0.0
        %v838 = vmax.f32 %v774, 0.0
        %v839 = vmax.f32 %v775, 0.0
        %v840 = vmax.f32 %v776, 0.0
        %v841 = vmax.f32 %v777, 0.0
        %v842 = vmax.f32 %v778, 0.0
        %v843 = vmax.f32 %v779, 0.0
        %v844 = vmax.f32 %v780, 0.0
        %v845 = vmax.f32 %v781, 0.0
        %v846 = vmax.f32 %v782, 0.0
        %v847 = vmax.f32 %v783, 0.0
        %v848 = vmax.f32 %v784, 0.0
        %v849 = vmax.f32 %v785, 0.0
        %v850 = vmax.f32 %v786, 0.0
        %v851 = vmax.f32 %v787, 0.0
        %v852 = vmax.f32 %v788, 0.0
        %v853 = vmax.f32 %v789, 0.0
        %v854 = vmax.f32 %v790, 0.0
        %v855 = vmax.f32 %v791, 0.0
        %v856 = vmax.f32 %v792, 0.0
        %v857 = vmax.f32 %v793, 0.0
        %v858 = vmax.f32 %v794, 0.0
        %v859 = vmax.f32 %v795, 0.0
        %v860 = vmax.f32 %v796, 0.0
        %v861 = vmax.f32 %v797, 0.0
        %v862 = vmax.f32 %v798, 0.0
        %v863 = vmax.f32 %v799, 0.0
        %v864 = vmax.f32 %v800, 0.0
        %v865 = vmax.f32 %v801, 0.0
        %v866 = vmax.f32 %v802, 0.0
        %v867 = vmin.f32 %v803, 6.0
        %v868 = vmin.f32 %v804, 6.0
        %v869 = vmin.f32 %v805, 6.0
        %v870 = vmin.f32 %v806, 6.0
        %v871 = vmin.f32 %v807, 6.0
        %v872 = vmin.f32 %v808, 6.0
        %v873 = vmin.f32 %v809, 6.0
        %v874 = vmin.f32 %v810, 6.0
        %v875 = vmin.f32 %v811, 6.0
        %v876 = vmin.f32 %v812, 6.0
        %v877 = vmin.f32 %v813, 6.0
        %v878 = vmin.f32 %v814, 6.0
        %v879 = vmin.f32 %v815, 6.0
        %v880 = vmin.f32 %v816, 6.0
        %v881 = vmin.f32 %v817, 6.0
        %v882 = vmin.f32 %v818, 6.0
        %v883 = vmin.f32 %v819, 6.0
        %v884 = vmin.f32 %v820, 6.0
        %v885 = vmin.f32 %v821, 6.0
        %v886 = vmin.f32 %v822, 6.0
        %v887 = vmin.f32 %v823, 6.0
        %v888 = vmin.f32 %v824, 6.0
        %v889 = vmin.f32 %v825, 6.0
        %v890 = vmin.f32 %v826, 6.0
        %v891 = vmin.f32 %v827, 6.0
        %v892 = vmin.f32 %v828, 6.0
        %v893 = vmin.f32 %v829, 6.0
        %v894 = vmin.f32 %v830, 6.0
        %v895 = vmin.f32 %v831, 6.0
        %v896 = vmin.f32 %v832, 6.0
        %v897 = vmin.f32 %v833, 6.0
        %v898 = vmin.f32 %v834, 6.0
        %v899 = vmin.f32 %v835, 6.0
        %v900 = vmin.f32 %v836, 6.0
        %v901 = vmin.f32 %v837, 6.0
        %v902 = vmin.f32 %v838, 6.0
        %v903 = vmin.f32 %v839, 6.0
        %v904 = vmin.f32 %v840, 6.0
        %v905 = vmin.f32 %v841, 6.0
        %v906 = vmin.f32 %v842, 6.0
        %v907 = vmin.f32 %v843, 6.0
        %v908 = vmin.f32 %v844, 6.0
        %v909 = vmin.f32 %v845, 6.0
        %v910 = vmin.f32 %v846, 6.0
        %v911 = vmin.f32 %v847, 6.0
        %v912 = vmin.f32 %v848, 6.0
        %v913 = vmin.f32 %v849, 6.0
        %v914 = vmin.f32 %v850, 6.0
        %v915 = vmin.f32 %v851, 6.0
        %v916 = vmin.f32 %v852, 6.0
        %v917 = vmin.f32 %v853, 6.0
        %v918 = vmin.f32 %v854, 6.0
        %v919 = vmin.f32 %v855, 6.0
        %v920 = vmin.f32 %v856, 6.0
        %v921 = vmin.f32 %v857, 6.0
        %v922 = vmin.f32 %v858, 6.0
        %v923 = vmin.f32 %v859, 6.0
        %v924 = vmin.f32 %v860, 6.0
        %v925 = vmin.f32 %v861, 6.0
        %v926 = vmin.f32 %v862, 6.0
        %v927 = vmin.f32 %v863, 6.0
        %v928 = vmin.f32 %v864, 6.0
        %v929 = vmin.f32 %v865, 6.0
        %v930 = vmin.f32 %v866, 6.0
        %v931 = vmul.f32 %v580, %v867
        %v932 = vmul.f32 %v582, %v868
        %v933 = vmul.f32 %v585, %v869
        %v934 = vmul.f32 %v587, %v870
        %v935 = vmul.f32 %v590, %v871
        %v936 = vmul.f32 %v592, %v872
        %v937 = vmul.f32 %v595, %v873
        %v938 = vmul.f32 %v597, %v874
        %v939 = vmul.f32 %v600, %v875
        %v940 = vmul.f32 %v602, %v876
        %v941 = vmul.f32 %v605, %v877
        %v942 = vmul.f32 %v607, %v878
        %v943 = vmul.f32 %v610, %v879
        %v944 = vmul.f32 %v612, %v880
        %v945 = vmul.f32 %v615, %v881
        %v946 = vmul.f32 %v617, %v882
        %v947 = vmul.f32 %v620, %v883
        %v948 = vmul.f32 %v622, %v884
        %v949 = vmul.f32 %v625, %v885
        %v950 = vmul.f32 %v627, %v886
        %v951 = vmul.f32 %v630, %v887
        %v952 = vmul.f32 %v632, %v888
        %v953 = vmul.f32 %v635, %v889
        %v954 = vmul.f32 %v637, %v890
        %v955 = vmul.f32 %v640, %v891
        %v956 = vmul.f32 %v642, %v892
        %v957 = vmul.f32 %v645, %v893
        %v958 = vmul.f32 %v647, %v894
        %v959 = vmul.f32 %v650, %v895
        %v960 = vmul.f32 %v652, %v896
        %v961 = vmul.f32 %v655, %v897
        %v962 = vmul.f32 %v657, %v898
        %v963 = vmul.f32 %v660, %v899
        %v964 = vmul.f32 %v662, %v900
        %v965 = vmul.f32 %v665, %v901
        %v966 = vmul.f32 %v667, %v902
        %v967 = vmul.f32 %v670, %v903
        %v968 = vmul.f32 %v672, %v904
        %v969 = vmul.f32 %v675, %v905
        %v970 = vmul.f32 %v677, %v906
        %v971 = vmul.f32 %v680, %v907
        %v972 = vmul.f32 %v682, %v908
        %v973 = vmul.f32 %v685, %v909
        %v974 = vmul.f32 %v687, %v910
        %v975 = vmul.f32 %v690, %v911
        %v976 = vmul.f32 %v692, %v912
        %v977 = vmul.f32 %v695, %v913
        %v978 = vmul.f32 %v697, %v914
        %v979 = vmul.f32 %v700, %v915
        %v980 = vmul.f32 %v702, %v916
        %v981 = vmul.f32 %v705, %v917
        %v982 = vmul.f32 %v707, %v918
        %v983 = vmul.f32 %v710, %v919
        %v984 = vmul.f32 %v712, %v920
        %v985 = vmul.f32 %v715, %v921
        %v986 = vmul.f32 %v717, %v922
        %v987 = vmul.f32 %v720, %v923
        %v988 = vmul.f32 %v722, %v924
        %v989 = vmul.f32 %v725, %v925
        %v990 = vmul.f32 %v727, %v926
        %v991 = vmul.f32 %v730, %v927
        %v992 = vmul.f32 %v732, %v928
        %v993 = vmul.f32 %v735, %v929
        %v994 = vmul.f32 %v737, %v930
        %v995 = vmul.f32 %v931, 0.16666667
        %v996 = vmul.f32 %v932, 0.16666667
        %v997 = vmul.f32 %v933, 0.16666667
        %v998 = vmul.f32 %v934, 0.16666667
        %v999 = vmul.f32 %v935, 0.16666667
        %v1000 = vmul.f32 %v936, 0.16666667
        %v1001 = vmul.f32 %v937, 0.16666667
        %v1002 = vmul.f32 %v938, 0.16666667
        %v1003 = vmul.f32 %v939, 0.16666667
        %v1004 = vmul.f32 %v940, 0.16666667
        %v1005 = vmul.f32 %v941, 0.16666667
        %v1006 = vmul.f32 %v942, 0.16666667
        %v1007 = vmul.f32 %v943, 0.16666667
        %v1008 = vmul.f32 %v944, 0.16666667
        %v1009 = vmul.f32 %v945, 0.16666667
        %v1010 = vmul.f32 %v946, 0.16666667
        %v1011 = vmul.f32 %v947, 0.16666667
        %v1012 = vmul.f32 %v948, 0.16666667
        %v1013 = vmul.f32 %v949, 0.16666667
        %v1014 = vmul.f32 %v950, 0.16666667
        %v1015 = vmul.f32 %v951, 0.16666667
        %v1016 = vmul.f32 %v952, 0.16666667
        %v1017 = vmul.f32 %v953, 0.16666667
        %v1018 = vmul.f32 %v954, 0.16666667
        %v1019 = vmul.f32 %v955, 0.16666667
        %v1020 = vmul.f32 %v956, 0.16666667
        %v1021 = vmul.f32 %v957, 0.16666667
        %v1022 = vmul.f32 %v958, 0.16666667
        %v1023 = vmul.f32 %v959, 0.16666667
        %v1024 = vmul.f32 %v960, 0.16666667
        %v1025 = vmul.f32 %v961, 0.16666667
        %v1026 = vmul.f32 %v962, 0.16666667
        %v1027 = vmul.f32 %v963, 0.16666667
        %v1028 = vmul.f32 %v964, 0.16666667
        %v1029 = vmul.f32 %v965, 0.16666667
        %v1030 = vmul.f32 %v966, 0.16666667
        %v1031 = vmul.f32 %v967, 0.16666667
        %v1032 = vmul.f32 %v968, 0.16666667
        %v1033 = vmul.f32 %v969, 0.16666667
        %v1034 = vmul.f32 %v970, 0.16666667
        %v1035 = vmul.f32 %v971, 0.16666667
        %v1036 = vmul.f32 %v972, 0.16666667
        %v1037 = vmul.f32 %v973, 0.16666667
        %v1038 = vmul.f32 %v974, 0.16666667
        %v1039 = vmul.f32 %v975, 0.16666667
        %v1040 = vmul.f32 %v976, 0.16666667
        %v1041 = vmul.f32 %v977, 0.16666667
        %v1042 = vmul.f32 %v978, 0.16666667
        %v1043 = vmul.f32 %v979, 0.16666667
        %v1044 = vmul.f32 %v980, 0.16666667
        %v1045 = vmul.f32 %v981, 0.16666667
        %v1046 = vmul.f32 %v982, 0.16666667
        %v1047 = vmul.f32 %v983, 0.16666667
        %v1048 = vmul.f32 %v984, 0.16666667
        %v1049 = vmul.f32 %v985, 0.16666667
        %v1050 = vmul.f32 %v986, 0.16666667
        %v1051 = vmul.f32 %v987, 0.16666667
        %v1052 = vmul.f32 %v988, 0.16666667
        %v1053 = vmul.f32 %v989, 0.16666667
        %v1054 = vmul.f32 %v990, 0.16666667
        %v1055 = vmul.f32 %v991, 0.16666667
        %v1056 = vmul.f32 %v992, 0.16666667
        %v1057 = vmul.f32 %v993, 0.16666667
        %v1058 = vmul.f32 %v994, 0.16666667
        %vm1059 = vcmask 654336
        %1060 = vst.msk [vmem:[%s244] sm:$0xff] %vm1059, %v995
        %1061 = vst.msk [vmem:[%s244 + $0x8] sm:$0xff] %vm1059, %v996
        %1062 = vst.msk [vmem:[%s244 + $0x10] sm:$0xff] %vm1059, %v997
        %1063 = vst.msk [vmem:[%s244 + $0x18] sm:$0xff] %vm1059, %v998
        %1064 = vst.msk [vmem:[%s244 + $0x20] sm:$0xff] %vm1059, %v999
        %1065 = vst.msk [vmem:[%s244 + $0x28] sm:$0xff] %vm1059, %v1000
        %1066 = vst.msk [vmem:[%s244 + $0x30] sm:$0xff] %vm1059, %v1001
        %1067 = vst.msk [vmem:[%s244 + $0x38] sm:$0xff] %vm1059, %v1002
        %1068 = vst.msk [vmem:[%s244 + $0x40] sm:$0xff] %vm1059, %v1003
        %1069 = vst.msk [vmem:[%s244 + $0x48] sm:$0xff] %vm1059, %v1004
        %1070 = vst.msk [vmem:[%s244 + $0x50] sm:$0xff] %vm1059, %v1005
        %1071 = vst.msk [vmem:[%s244 + $0x58] sm:$0xff] %vm1059, %v1006
        %1072 = vst.msk [vmem:[%s244 + $0x60] sm:$0xff] %vm1059, %v1007
        %1073 = vst.msk [vmem:[%s244 + $0x68] sm:$0xff] %vm1059, %v1008
        %1074 = vst.msk [vmem:[%s244 + $0x70] sm:$0xff] %vm1059, %v1009
        %1075 = vst.msk [vmem:[%s244 + $0x78] sm:$0xff] %vm1059, %v1010
        %1076 = vst.msk [vmem:[%s244 + $0x80] sm:$0xff] %vm1059, %v1011
        %1077 = vst.msk [vmem:[%s244 + $0x88] sm:$0xff] %vm1059, %v1012
        %1078 = vst.msk [vmem:[%s244 + $0x90] sm:$0xff] %vm1059, %v1013
        %1079 = vst.msk [vmem:[%s244 + $0x98] sm:$0xff] %vm1059, %v1014
        %1080 = vst.msk [vmem:[%s244 + $0xa0] sm:$0xff] %vm1059, %v1015
        %1081 = vst.msk [vmem:[%s244 + $0xa8] sm:$0xff] %vm1059, %v1016
        %1082 = vst.msk [vmem:[%s244 + $0xb0] sm:$0xff] %vm1059, %v1017
        %1083 = vst.msk [vmem:[%s244 + $0xb8] sm:$0xff] %vm1059, %v1018
        %1084 = vst.msk [vmem:[%s244 + $0xc0] sm:$0xff] %vm1059, %v1019
        %1085 = vst.msk [vmem:[%s244 + $0xc8] sm:$0xff] %vm1059, %v1020
        %1086 = vst.msk [vmem:[%s244 + $0xd0] sm:$0xff] %vm1059, %v1021
        %1087 = vst.msk [vmem:[%s244 + $0xd8] sm:$0xff] %vm1059, %v1022
        %1088 = vst.msk [vmem:[%s244 + $0xe0] sm:$0xff] %vm1059, %v1023
        %1089 = vst.msk [vmem:[%s244 + $0xe8] sm:$0xff] %vm1059, %v1024
        %1090 = vst.msk [vmem:[%s244 + $0xf0] sm:$0xff] %vm1059, %v1025
        %1091 = vst.msk [vmem:[%s244 + $0xf8] sm:$0xff] %vm1059, %v1026
        %1092 = vst.msk [vmem:[%s244 + $0x100] sm:$0xff] %vm1059, %v1027
        %1093 = vst.msk [vmem:[%s244 + $0x108] sm:$0xff] %vm1059, %v1028
        %1094 = vst.msk [vmem:[%s244 + $0x110] sm:$0xff] %vm1059, %v1029
        %1095 = vst.msk [vmem:[%s244 + $0x118] sm:$0xff] %vm1059, %v1030
        %1096 = vst.msk [vmem:[%s244 + $0x120] sm:$0xff] %vm1059, %v1031
        %1097 = vst.msk [vmem:[%s244 + $0x128] sm:$0xff] %vm1059, %v1032
        %1098 = vst.msk [vmem:[%s244 + $0x130] sm:$0xff] %vm1059, %v1033
        %1099 = vst.msk [vmem:[%s244 + $0x138] sm:$0xff] %vm1059, %v1034
        %1100 = vst.msk [vmem:[%s244 + $0x140] sm:$0xff] %vm1059, %v1035
        %1101 = vst.msk [vmem:[%s244 + $0x148] sm:$0xff] %vm1059, %v1036
        %1102 = vst.msk [vmem:[%s244 + $0x150] sm:$0xff] %vm1059, %v1037
        %1103 = vst.msk [vmem:[%s244 + $0x158] sm:$0xff] %vm1059, %v1038
        %1104 = vst.msk [vmem:[%s244 + $0x160] sm:$0xff] %vm1059, %v1039
        %1105 = vst.msk [vmem:[%s244 + $0x168] sm:$0xff] %vm1059, %v1040
        %1106 = vst.msk [vmem:[%s244 + $0x170] sm:$0xff] %vm1059, %v1041
        %1107 = vst.msk [vmem:[%s244 + $0x178] sm:$0xff] %vm1059, %v1042
        %1108 = vst.msk [vmem:[%s244 + $0x180] sm:$0xff] %vm1059, %v1043
        %1109 = vst.msk [vmem:[%s244 + $0x188] sm:$0xff] %vm1059, %v1044
        %1110 = vst.msk [vmem:[%s244 + $0x190] sm:$0xff] %vm1059, %v1045
        %1111 = vst.msk [vmem:[%s244 + $0x198] sm:$0xff] %vm1059, %v1046
        %1112 = vst.msk [vmem:[%s244 + $0x1a0] sm:$0xff] %vm1059, %v1047
        %1113 = vst.msk [vmem:[%s244 + $0x1a8] sm:$0xff] %vm1059, %v1048
        %1114 = vst.msk [vmem:[%s244 + $0x1b0] sm:$0xff] %vm1059, %v1049
        %1115 = vst.msk [vmem:[%s244 + $0x1b8] sm:$0xff] %vm1059, %v1050
        %1116 = vst.msk [vmem:[%s244 + $0x1c0] sm:$0xff] %vm1059, %v1051
        %1117 = vst.msk [vmem:[%s244 + $0x1c8] sm:$0xff] %vm1059, %v1052
        %1118 = vst.msk [vmem:[%s244 + $0x1d0] sm:$0xff] %vm1059, %v1053
        %1119 = vst.msk [vmem:[%s244 + $0x1d8] sm:$0xff] %vm1059, %v1054
        %1120 = vst.msk [vmem:[%s244 + $0x1e0] sm:$0xff] %vm1059, %v1055
        %1121 = vst.msk [vmem:[%s244 + $0x1e8] sm:$0xff] %vm1059, %v1056
        %1122 = vst.msk [vmem:[%s244 + $0x1f0] sm:$0xff] %vm1059, %v1057
        %1123 = vst.msk [vmem:[%s244 + $0x1f8] sm:$0xff] %vm1059, %v1058
        %s1124 = smul.u32 64, %s21
        %p1125 = scmp.lt.s32.totalorder %s1124, 127
        %s1126 = scalar_select %p1125, %s1124, 127
        %p1127 = scmp.lt.s32.totalorder %s22, 0
        %s1128 = scalar_select %p1127, %s22, 0
        %s1129 = sadd.s32 %s1128, %s1126
        %s1130 = smul.addr %s1129, 8
        %s1131 = scalar_lea.vmem %s3, %s1130
        // Predicated region
        $region37: #{tpu_custom_call.1} parent=31 // pred_check
          %p1132 = pneg %p127
        $region38: #{tpu_custom_call.1} parent=31 // pred_check_branch
          %1134 = sbr.rel (%p1132) target = $region40
        $region39: #{tpu_custom_call.1} parent=31 // pred_region
          %s1135 = smul.u32 64, %s21
        $region40: #{tpu_custom_call.1} parent=31 // pred_fallthru
          _
      $region32: #{tpu_custom_call.1} parent=5 // pred_fallthru
        _
      %p1136 = scmp.le.s32.totalorder 2, %s12
      // Predicated region
      $region41: #{tpu_custom_call.1} parent=5 // pred_check
        %p1137 = pneg %p1136
      $region42: #{tpu_custom_call.1} parent=5 // pred_check_branch
        %1139 = sbr.rel (%p1137) target = $region44
      $region43: #{tpu_custom_call.1} parent=5 // pred_region
        %s1140 = ssub.s32 %s12, 2
        // Predicated region
        $region45: #{tpu_custom_call.1} parent=43 // pred_check
          %p1141 = pneg %p133
        $region46: #{tpu_custom_call.1} parent=43 // pred_check_branch
          %1143 = sbr.rel (%p1141) target = $region48
        $region47: #{tpu_custom_call.1} parent=43 // pred_region
          %s1144 = smul.u32 64, %s23
          %p1145 = scmp.lt.s32.totalorder %s1144, 127
          %s1146 = scalar_select %p1145, %s1144, 127
          %p1147 = scmp.lt.s32.totalorder %s24, 0
          %s1148 = scalar_select %p1147, %s24, 0
          %s1149 = sadd.s32 %s1148, %s1146
          %s1150 = smul.addr %s1149, 8
          %s1151 = scalar_lea.vmem %s3, %s1150
        $region48: #{tpu_custom_call.1} parent=43 // pred_fallthru
          _
      $region44: #{tpu_custom_call.1} parent=5 // pred_fallthru
        _
    $region6: #{tpu_custom_call.1} parent=1 // loop_footer
      %s16 = sadd.s32 1, %s12
    $region7: #{tpu_custom_call.1} parent=1 // loop_footer_branch
      %11 = sbr.rel target = $region3
    $region8: #{tpu_custom_call.1} parent=1 // loop_exit
      _
    %1152 = vsyncpa [#allocation3], 1
    %s1153 = scalar_lea.sflag [#allocation3], 1
    %1154 = vsyncpa %s1153, 1

</llo_original>
